<compile_context>
chip_gen: v7x
topology: tpu7x:2x2x1
jax: 0.10.0
libtpu: 0.0.40
codegen_flags: <defaults>
</compile_context>

<pallas_src>
import math

import jax
import jax.numpy as jnp
from jax.experimental import pallas as pl
from jax.experimental.pallas import tpu as pltpu


# ---------------------------------------------------------------------------
# Pallas kernel
# ---------------------------------------------------------------------------
def make_encoder_kernel(layers, Bt, T, Tp, E, H, Lp, apply_valid_mask):
    sqrt_half = math.sqrt(0.5)
    M = Bt * Tp                                   # fused matmul M dimension

    def kernel(x_ref,          # (Bt, Tp, E)   bf16
               inv_len_ref,    # (Bt, 1)       f32   (1 / max(length, 1))
               lkeep_ref,      # (M, 1)        f32   zero at t == 0
               rkeep_ref,      # (M, 1)        f32   zero at t == Tp-1
               vkeep_ref,      # (M, 1)        f32   zero at t >= T (only if Tp > T)
               w_fc1_ref,      # (E, H)        bf16
               b_fc1_ref,      # (1, H)        f32
               wl_ref,         # (1, H, 2H)    bf16  tap for h[t-1]
               wc_ref,         # (1, H, 2H)    bf16  tap for h[t]
               wr_ref,         # (1, H, 2H)    bf16  tap for h[t+1]
               b_conv_ref,     # (1, 1, 2H)    f32
               w_fc2_ref,      # (H, Lp)       bf16
               b_fc2_ref,      # (1, Lp)       f32
               out_ref,        # (Bt, Lp)      f32
               h_ref):         # VMEM scratch (M, H) f32, carried across layer steps
        l = pl.program_id(1)

        # --- fc1, only on the first layer step of each batch tile ----------
        @pl.when(l == 0)
        def _():
            # TODO(synk): dropout is identity here (eval mode).
            x = x_ref[...].reshape(M, E)
            h0 = jnp.dot(x, w_fc1_ref[...],
                         preferred_element_type=jnp.float32) + b_fc1_ref[...]
            if apply_valid_mask:
                h0 = h0 * vkeep_ref[...]          # zero the extra padded time rows
            h_ref[...] = h0

        # --- conv layer l: Conv1d(k=3, pad=1) as three tap matmuls ----------
        h = h_ref[...]                            # (M, H) f32 (also the residual)
        h_b = h.astype(jnp.bfloat16)
        # roll goes to the XLU slot; boundary zero-padding via precomputed masks.
        left_b = (pltpu.roll(h, 1, axis=0) * lkeep_ref[...]).astype(jnp.bfloat16)
        right_b = (pltpu.roll(h, M - 1, axis=0) * rkeep_ref[...]).astype(jnp.bfloat16)

        y = (jnp.dot(h_b, wc_ref[0], preferred_element_type=jnp.float32)
             + jnp.dot(left_b, wl_ref[0], preferred_element_type=jnp.float32)
             + jnp.dot(right_b, wr_ref[0], preferred_element_type=jnp.float32)
             + b_conv_ref[0])                     # (M, 2H) f32

        # GLU over channels; exact sigmoid via a single EUP tanh pass.
        a = y[:, :H]
        g = y[:, H:]
        sig = 0.5 * jnp.tanh(0.5 * g) + 0.5
        h_new = (a * sig + h) * sqrt_half
        if apply_valid_mask:
            h_new = h_new * vkeep_ref[...]
        h_ref[...] = h_new

        # --- time pooling + fc2 on the last layer step ----------------------
        @pl.when(l == layers - 1)
        def _():
            # Padded token positions contribute to the sum and the divisor is
            # the true length — matches the PyTorch reference exactly.
            s = jnp.sum(h_new.reshape(Bt, Tp, H), axis=1) * inv_len_ref[...]   # (Bt, H)
            out_ref[...] = (jnp.dot(s.astype(jnp.bfloat16), w_fc2_ref[...],
                                    preferred_element_type=jnp.float32)
                            + b_fc2_ref[...])

    return kernel


# ---------------------------------------------------------------------------
# Wrapper
# ---------------------------------------------------------------------------
def conv_encoder_forward(tokens, lengths, params, layers, batch_tile=None):
    tok_emb, pos_emb, w_fc1, b_fc1, w_conv, b_conv, w_fc2, b_fc2 = params
    B, T = tokens.shape
    E = tok_emb.shape[1]
    H = w_fc1.shape[1]
    L = w_fc2.shape[1]

    Tp = ((T + 7) // 8) * 8                       # layout-preserving reshapes
    Lp = ((L + 127) // 128) * 128                 # lane-dense output stores
    Lp = max(Lp, 128)

    # Batch tile: target M = Bt*Tp ~ 512; keep >= 2 grid steps when possible
    # so v7x's second TensorCore gets work ("parallel" batch axis).
    if batch_tile is None:
        target_m = 512
        bt = max(1, target_m // Tp)
        if B >= 16:
            bt = min(bt, pl.cdiv(B, 2))
        if bt >= B:
            bt = B
        else:
            bt = max(8, (bt // 8) * 8)            # 8-aligned when it tiles the batch
        batch_tile = bt
    Bt = int(batch_tile)
    Bp = pl.cdiv(B, Bt) * Bt
    if Bt != Bp and Bt % 8 != 0:
        raise ValueError("batch_tile must be a multiple of 8 when it tiles the batch")
    M = Bt * Tp
    num_tiles = Bp // Bt

    # Glue in plain JAX: positions + embedding gathers.
    # TODO(synk): vocab embedding gather has no clean Pallas equivalent; the hot
    # path (fc1 / conv stack / fc2) is the Pallas kernel below.
    positions = jnp.where(tokens == 0, 0,
                          jnp.arange(1, T + 1, dtype=jnp.int32)[None, :])
    x_emb = (tok_emb[tokens] + pos_emb[positions]).astype(jnp.bfloat16)   # (B, T, E)
    inv_len = (1.0 / jnp.maximum(lengths, 1).astype(jnp.float32)).reshape(B, 1)

    if Tp != T or Bp != B:
        x_emb = jnp.pad(x_emb, ((0, Bp - B), (0, Tp - T), (0, 0)))
    if Bp != B:
        inv_len = jnp.pad(inv_len, ((0, Bp - B), (0, 0)), constant_values=1.0)

    # Boundary keep-masks (built once; constant across batch tiles).
    t_in_tile = jnp.tile(jnp.arange(Tp, dtype=jnp.int32), Bt)                # (M,)
    lkeep = (t_in_tile != 0).astype(jnp.float32).reshape(M, 1)
    rkeep = (t_in_tile != Tp - 1).astype(jnp.float32).reshape(M, 1)
    vkeep = (t_in_tile < T).astype(jnp.float32).reshape(M, 1)
    apply_valid_mask = Tp != T

    # MXU-ready weights: bf16 operands, conv taps pre-split (no in-kernel concat).
    w_fc1_b = w_fc1.astype(jnp.bfloat16)                                     # (E, H)
    wl = w_conv[:, 0].astype(jnp.bfloat16)                                   # (layers, H, 2H)
    wc = w_conv[:, 1].astype(jnp.bfloat16)
    wr = w_conv[:, 2].astype(jnp.bfloat16)
    b_fc1_f = b_fc1.astype(jnp.float32).reshape(1, H)
    b_conv_f = b_conv.astype(jnp.float32).reshape(layers, 1, 2 * H)
    w_fc2_p = jnp.zeros((H, Lp), jnp.bfloat16).at[:, :L].set(w_fc2.astype(jnp.bfloat16))
    b_fc2_p = jnp.zeros((1, Lp), jnp.float32).at[:, :L].set(
        b_fc2.astype(jnp.float32).reshape(1, L))

    kernel = make_encoder_kernel(layers, Bt, T, Tp, E, H, Lp, apply_valid_mask)

    batch2 = lambda i, l: (i, 0)
    batch3 = lambda i, l: (i, 0, 0)
    const2 = lambda i, l: (0, 0)
    layer3 = lambda i, l: (l, 0, 0)

    grid_spec = pltpu.PrefetchScalarGridSpec(
        num_scalar_prefetch=0,
        grid=(num_tiles, layers),
        in_specs=[
            pl.BlockSpec((Bt, Tp, E), batch3),        # x (fetched once per batch tile)
            pl.BlockSpec((Bt, 1), batch2),            # inv_len
            pl.BlockSpec((M, 1), const2),             # left keep mask
            pl.BlockSpec((M, 1), const2),             # right keep mask
            pl.BlockSpec((M, 1), const2),             # time-validity keep mask
            pl.BlockSpec((E, H), const2),             # w_fc1
            pl.BlockSpec((1, H), const2),             # b_fc1
            pl.BlockSpec((1, H, 2 * H), layer3),      # conv tap h[t-1]  (per layer)
            pl.BlockSpec((1, H, 2 * H), layer3),      # conv tap h[t]
            pl.BlockSpec((1, H, 2 * H), layer3),      # conv tap h[t+1]
            pl.BlockSpec((1, 1, 2 * H), layer3),      # conv bias
            pl.BlockSpec((H, Lp), const2),            # w_fc2 (lane-padded)
            pl.BlockSpec((1, Lp), const2),            # b_fc2 (lane-padded)
        ],
        out_specs=pl.BlockSpec((Bt, Lp), batch2),
        scratch_shapes=[pltpu.VMEM((M, H), jnp.float32)],   # carried activations
    )

    # Size the VMEM limit to the generation (~48 MiB on v7x, ~96 MiB on v5e/v6e).
    try:
        vmem_cap = pltpu.get_tpu_info().vmem_capacity_bytes
    except Exception:                                  # perf knob only; safe default
        vmem_cap = 64 * 1024 * 1024
    vmem_limit = min(int(vmem_cap) * 3 // 4, 96 * 1024 * 1024)

    out = pl.pallas_call(
        kernel,
        out_shape=jax.ShapeDtypeStruct((Bp, Lp), jnp.float32),
        grid_spec=grid_spec,
        compiler_params=pltpu.CompilerParams(
            dimension_semantics=("parallel", "arbitrary"),
            vmem_limit_bytes=vmem_limit,
        ),
    )(x_emb, inv_len, lkeep, rkeep, vkeep,
      w_fc1_b, b_fc1_f, wl, wc, wr, b_conv_f, w_fc2_p, b_fc2_p)

    return out[:B, :L]


# ---------------------------------------------------------------------------
# Pure-JAX reference (for a correctness check)
# ---------------------------------------------------------------------------
def reference_forward(tokens, lengths, params, layers):
    tok_emb, pos_emb, w_fc1, b_fc1, w_conv, b_conv, w_fc2, b_fc2 = params
    B, T = tokens.shape
    H = w_fc1.shape[1]
    positions = jnp.where(tokens == 0, 0,
                          jnp.arange(1, T + 1, dtype=jnp.int32)[None, :])
    x = tok_emb[tokens] + pos_emb[positions]
    h = x @ w_fc1 + b_fc1
    for l in range(layers):
        residual = h
        xp = jnp.pad(h, ((0, 0), (1, 1), (0, 0)))
        y = sum(jnp.einsum("btc,cd->btd", xp[:, k:k + T], w_conv[l, k])
                for k in range(3)) + b_conv[l]
        a, g = y[..., :H], y[..., H:]
        h = (a * jax.nn.sigmoid(g) + residual) * math.sqrt(0.5)
    s = h.sum(axis=1) / jnp.maximum(lengths, 1).astype(jnp.float32)[:, None]
    return s @ w_fc2 + b_fc2


# ---------------------------------------------------------------------------
# Deterministic parameter construction (matching the module's __init__ shapes)
# ---------------------------------------------------------------------------
def build_params(key, vocab_size, max_note_len, E, H, layers, L, dropout):
    ks = jax.random.split(key, 4 + layers)

    tok_emb = 0.1 * jax.random.normal(ks[0], (vocab_size, E), jnp.float32)
    tok_emb = tok_emb.at[0].set(0.0)                         # padding_idx=0
    pos_emb = 0.1 * jax.random.normal(ks[1], (max_note_len + 1, E), jnp.float32)
    pos_emb = pos_emb.at[0].set(0.0)

    # fc1: Linear(E, H) with std sqrt((1-dropout)/E), torch layout (out, in).
    # weight_norm at init is the identity re-parameterization -> use raw weights.
    w_fc1 = (math.sqrt((1.0 - dropout) / E)
             * jax.random.normal(ks[2], (H, E), jnp.float32)).T          # (E, H)
    b_fc1 = jnp.zeros((1, H), jnp.float32)

    # convs: Conv1d(H, 2H, 3, padding=1), std sqrt(4*(1-dropout)/(3*H)),
    # torch layout (out=2H, in=H, k=3) -> kernel layout (layers, 3, H, 2H).
    conv_std = math.sqrt(4.0 * (1.0 - dropout) / (3 * H))
    w_conv_list, b_conv_list = [], []
    for l in range(layers):
        w = conv_std * jax.random.normal(ks[3 + l], (2 * H, H, 3), jnp.float32)
        w_conv_list.append(jnp.transpose(w, (2, 1, 0)))                  # (3, H, 2H)
        b_conv_list.append(jnp.zeros((2 * H,), jnp.float32))
    w_conv = jnp.stack(w_conv_list)                                      # (layers, 3, H, 2H)
    b_conv = jnp.stack(b_conv_list)                                      # (layers, 2H)

    # fc2: Linear(H, L), std sqrt(1/H).
    w_fc2 = (math.sqrt(1.0 / H)
             * jax.random.normal(ks[3 + layers], (L, H), jnp.float32)).T  # (H, L)
    b_fc2 = jnp.zeros((1, L), jnp.float32)

    return (tok_emb, pos_emb, w_fc1, b_fc1, w_conv, b_conv, w_fc2, b_fc2)


if __name__ == "__main__":
    # Small config consistent with the module.
    B, T = 2, 16
    VOCAB = 50
    MAX_NOTE_LEN = 16
    E = 32          # word_emb_size
    H = 32          # hidden_size
    LAYERS = 2
    L = 8           # label_space_size
    DROPOUT = 0.2   # used only for init stds; forward is eval-mode (no dropout)

    key = jax.random.PRNGKey(0)
    k_tok, k_par = jax.random.split(key)

    tokens = jax.random.randint(k_tok, (B, T), 1, VOCAB, dtype=jnp.int32)
    tokens = tokens.at[0, 12:].set(0)      # padded positions
    tokens = tokens.at[1, 14:].set(0)
    lengths = jnp.sum(tokens != 0, axis=1).astype(jnp.int32)

    params = build_params(k_par, VOCAB, MAX_NOTE_LEN, E, H, LAYERS, L, DROPOUT)

    out = jax.block_until_ready(conv_encoder_forward(tokens, lengths, params, LAYERS))
    ref = jax.block_until_ready(reference_forward(tokens, lengths, params, LAYERS))

    assert out.shape == (B, L)
    # bf16 MXU operands (f32 accumulation) => slightly looser tolerance than f32.
    assert jnp.allclose(out, ref, atol=2e-2, rtol=2e-2), (out, ref)

    print("KERNEL_OK")
</pallas_src>

<mosaic_0001>
module attributes {stable_mosaic.version = 11 : i64} {
  func.func @kernel(%arg0: i32, %arg1: i32, %arg2: memref<2x16x32xbf16, #tpu.memory_space<vmem>>, %arg3: memref<2x1xf32, #tpu.memory_space<vmem>>, %arg4: memref<32x1xf32, #tpu.memory_space<vmem>>, %arg5: memref<32x1xf32, #tpu.memory_space<vmem>>, %arg6: memref<32x1xf32, #tpu.memory_space<vmem>>, %arg7: memref<32x32xbf16, #tpu.memory_space<vmem>>, %arg8: memref<1x32xf32, #tpu.memory_space<vmem>>, %arg9: memref<1x32x64xbf16, #tpu.memory_space<vmem>>, %arg10: memref<1x32x64xbf16, #tpu.memory_space<vmem>>, %arg11: memref<1x32x64xbf16, #tpu.memory_space<vmem>>, %arg12: memref<1x1x64xf32, #tpu.memory_space<vmem>>, %arg13: memref<32x128xbf16, #tpu.memory_space<vmem>>, %arg14: memref<1x128xf32, #tpu.memory_space<vmem>>, %arg15: memref<2x128xf32, #tpu.memory_space<vmem>>, %arg16: memref<32x32xf32, #tpu.memory_space<vmem>>) attributes {dimension_semantics = [#tpu.dimension_semantics<parallel>, #tpu.dimension_semantics<arbitrary>], iteration_bounds = array<i64: 1, 2>, scalar_prefetch = 0 : i64, scratch_operands = 1 : i64, tpu.core_type = #tpu.core_type<tc>, window_params = [{transform_indices = @transform_0, window_bounds = array<i64: 2, 16, 32>}, {transform_indices = @transform_1, window_bounds = array<i64: 2, 1>}, {pipeline_mode = #tpu.pipeline_mode<synchronous>, transform_indices = @transform_2, window_bounds = array<i64: 32, 1>}, {pipeline_mode = #tpu.pipeline_mode<synchronous>, transform_indices = @transform_3, window_bounds = array<i64: 32, 1>}, {pipeline_mode = #tpu.pipeline_mode<synchronous>, transform_indices = @transform_4, window_bounds = array<i64: 32, 1>}, {pipeline_mode = #tpu.pipeline_mode<synchronous>, transform_indices = @transform_5, window_bounds = array<i64: 32, 32>}, {pipeline_mode = #tpu.pipeline_mode<synchronous>, transform_indices = @transform_6, window_bounds = array<i64: 1, 32>}, {transform_indices = @transform_7, window_bounds = array<i64: 1, 32, 64>}, {transform_indices = @transform_8, window_bounds = array<i64: 1, 32, 64>}, {transform_indices = @transform_9, window_bounds = array<i64: 1, 32, 64>}, {transform_indices = @transform_10, window_bounds = array<i64: 1, 1, 64>}, {pipeline_mode = #tpu.pipeline_mode<synchronous>, transform_indices = @transform_11, window_bounds = array<i64: 32, 128>}, {pipeline_mode = #tpu.pipeline_mode<synchronous>, transform_indices = @transform_12, window_bounds = array<i64: 1, 128>}, {transform_indices = @transform_13, window_bounds = array<i64: 2, 128>}]} {
    %c0_i32 = arith.constant 0 : i32
    %0 = arith.cmpi eq, %arg1, %c0_i32 : i32
    %1 = arith.extui %0 : i1 to i32
    %c0_i32_0 = arith.constant 0 : i32
    %2 = arith.cmpi ne, %1, %c0_i32_0 : i32
    scf.if %2 {
      %c0_28 = arith.constant 0 : index
      %c0_29 = arith.constant 0 : index
      %c0_30 = arith.constant 0 : index
      %47 = vector.load %arg2[%c0_28, %c0_29, %c0_30] : memref<2x16x32xbf16, #tpu.memory_space<vmem>>, vector<2x16x32xbf16>
      %48 = vector.shape_cast %47 : vector<2x16x32xbf16> to vector<32x32xbf16>
      %c0_31 = arith.constant 0 : index
      %c0_32 = arith.constant 0 : index
      %49 = vector.load %arg7[%c0_31, %c0_32] : memref<32x32xbf16, #tpu.memory_space<vmem>>, vector<32x32xbf16>
      %cst_33 = arith.constant dense<0.000000e+00> : vector<32x32xf32>
      %50 = tpu.matmul %48, %49, %cst_33 {dimension_numbers = #tpu.dot_dimension_numbers<[1], [0], [0], [1], [0, 0, 1, 1], [], []>} : vector<32x32xbf16>, vector<32x32xbf16>, vector<32x32xf32> -> vector<32x32xf32>
      %c0_34 = arith.constant 0 : index
      %c0_35 = arith.constant 0 : index
      %51 = vector.load %arg8[%c0_34, %c0_35] : memref<1x32xf32, #tpu.memory_space<vmem>>, vector<1x32xf32>
      %52 = vector.broadcast %51 : vector<1x32xf32> to vector<32x32xf32>
      %53 = arith.addf %50, %52 : vector<32x32xf32>
      %c0_36 = arith.constant 0 : index
      %c0_37 = arith.constant 0 : index
      %54 = vector.load %arg16[%c0_36, %c0_37] : memref<32x32xf32, #tpu.memory_space<vmem>>, vector<32x32xf32>
      tpu.vector_store %arg16[%c0_36, %c0_37], %53 {strides = array<i32>} : memref<32x32xf32, #tpu.memory_space<vmem>>, vector<32x32xf32>,
    } else {
    }
    %c0 = arith.constant 0 : index
    %c0_1 = arith.constant 0 : index
    %3 = vector.load %arg16[%c0, %c0_1] : memref<32x32xf32, #tpu.memory_space<vmem>>, vector<32x32xf32>
    %4 = arith.truncf %3 : vector<32x32xf32> to vector<32x32xbf16>
    %c1_i32 = arith.constant 1 : i32
    %5 = tpu.dynamic_rotate %3 by %c1_i32 dim 0 : vector<32x32xf32>, i32 -> vector<32x32xf32>
    %c0_2 = arith.constant 0 : index
    %c0_3 = arith.constant 0 : index
    %6 = vector.load %arg4[%c0_2, %c0_3] : memref<32x1xf32, #tpu.memory_space<vmem>>, vector<32x1xf32>
    %7 = vector.broadcast %6 : vector<32x1xf32> to vector<32x32xf32>
    %8 = arith.mulf %5, %7 : vector<32x32xf32>
    %9 = arith.truncf %8 : vector<32x32xf32> to vector<32x32xbf16>
    %c31_i32 = arith.constant 31 : i32
    %10 = tpu.dynamic_rotate %3 by %c31_i32 dim 0 : vector<32x32xf32>, i32 -> vector<32x32xf32>
    %c0_4 = arith.constant 0 : index
    %c0_5 = arith.constant 0 : index
    %11 = vector.load %arg5[%c0_4, %c0_5] : memref<32x1xf32, #tpu.memory_space<vmem>>, vector<32x1xf32>
    %12 = vector.broadcast %11 : vector<32x1xf32> to vector<32x32xf32>
    %13 = arith.mulf %10, %12 : vector<32x32xf32>
    %14 = arith.truncf %13 : vector<32x32xf32> to vector<32x32xbf16>
    %c0_6 = arith.constant 0 : index
    %c0_7 = arith.constant 0 : index
    %c0_8 = arith.constant 0 : index
    %15 = vector.load %arg10[%c0_6, %c0_7, %c0_8] : memref<1x32x64xbf16, #tpu.memory_space<vmem>>, vector<1x32x64xbf16>
    %16 = vector.shape_cast %15 : vector<1x32x64xbf16> to vector<32x64xbf16>
    %cst = arith.constant dense<0.000000e+00> : vector<32x64xf32>
    %17 = tpu.matmul %4, %16, %cst {dimension_numbers = #tpu.dot_dimension_numbers<[1], [0], [0], [1], [0, 0, 1, 1], [], []>} : vector<32x32xbf16>, vector<32x64xbf16>, vector<32x64xf32> -> vector<32x64xf32>
    %c0_9 = arith.constant 0 : index
    %c0_10 = arith.constant 0 : index
    %c0_11 = arith.constant 0 : index
    %18 = vector.load %arg9[%c0_9, %c0_10, %c0_11] : memref<1x32x64xbf16, #tpu.memory_space<vmem>>, vector<1x32x64xbf16>
    %19 = vector.shape_cast %18 : vector<1x32x64xbf16> to vector<32x64xbf16>
    %cst_12 = arith.constant dense<0.000000e+00> : vector<32x64xf32>
    %20 = tpu.matmul %9, %19, %cst_12 {dimension_numbers = #tpu.dot_dimension_numbers<[1], [0], [0], [1], [0, 0, 1, 1], [], []>} : vector<32x32xbf16>, vector<32x64xbf16>, vector<32x64xf32> -> vector<32x64xf32>
    %21 = arith.addf %17, %20 : vector<32x64xf32>
    %c0_13 = arith.constant 0 : index
    %c0_14 = arith.constant 0 : index
    %c0_15 = arith.constant 0 : index
    %22 = vector.load %arg11[%c0_13, %c0_14, %c0_15] : memref<1x32x64xbf16, #tpu.memory_space<vmem>>, vector<1x32x64xbf16>
    %23 = vector.shape_cast %22 : vector<1x32x64xbf16> to vector<32x64xbf16>
    %cst_16 = arith.constant dense<0.000000e+00> : vector<32x64xf32>
    %24 = tpu.matmul %14, %23, %cst_16 {dimension_numbers = #tpu.dot_dimension_numbers<[1], [0], [0], [1], [0, 0, 1, 1], [], []>} : vector<32x32xbf16>, vector<32x64xbf16>, vector<32x64xf32> -> vector<32x64xf32>
    %25 = arith.addf %21, %24 : vector<32x64xf32>
    %c0_17 = arith.constant 0 : index
    %c0_18 = arith.constant 0 : index
    %c0_19 = arith.constant 0 : index
    %26 = vector.load %arg12[%c0_17, %c0_18, %c0_19] : memref<1x1x64xf32, #tpu.memory_space<vmem>>, vector<1x1x64xf32>
    %27 = vector.shape_cast %26 : vector<1x1x64xf32> to vector<1x64xf32>
    %28 = vector.broadcast %27 : vector<1x64xf32> to vector<32x64xf32>
    %29 = arith.addf %25, %28 : vector<32x64xf32>
    %30 = vector.extract_strided_slice %29 {offsets = [0, 0], sizes = [32, 32], strides = [1, 1]} : vector<32x64xf32> to vector<32x32xf32>
    %31 = vector.extract_strided_slice %29 {offsets = [0, 32], sizes = [32, 32], strides = [1, 1]} : vector<32x64xf32> to vector<32x32xf32>
    %cst_20 = arith.constant 5.000000e-01 : f32
    %32 = vector.broadcast %cst_20 : f32 to vector<32x32xf32>
    %33 = arith.mulf %32, %31 : vector<32x32xf32>
    %34 = math.tanh %33 : vector<32x32xf32>
    %cst_21 = arith.constant 5.000000e-01 : f32
    %35 = vector.broadcast %cst_21 : f32 to vector<32x32xf32>
    %36 = arith.mulf %35, %34 : vector<32x32xf32>
    %cst_22 = arith.constant 5.000000e-01 : f32
    %37 = vector.broadcast %cst_22 : f32 to vector<32x32xf32>
    %38 = arith.addf %36, %37 : vector<32x32xf32>
    %39 = arith.mulf %30, %38 : vector<32x32xf32>
    %40 = arith.addf %39, %3 : vector<32x32xf32>
    %cst_23 = arith.constant 0.707106769 : f32
    %41 = vector.broadcast %cst_23 : f32 to vector<32x32xf32>
    %42 = arith.mulf %40, %41 : vector<32x32xf32>
    %c0_24 = arith.constant 0 : index
    %c0_25 = arith.constant 0 : index
    %43 = vector.load %arg16[%c0_24, %c0_25] : memref<32x32xf32, #tpu.memory_space<vmem>>, vector<32x32xf32>
    tpu.vector_store %arg16[%c0_24, %c0_25], %42 {strides = array<i32>} : memref<32x32xf32, #tpu.memory_space<vmem>>, vector<32x32xf32>,
    %c1_i32_26 = arith.constant 1 : i32
    %44 = arith.cmpi eq, %arg1, %c1_i32_26 : i32
    %45 = arith.extui %44 : i1 to i32
    %c0_i32_27 = arith.constant 0 : i32
    %46 = arith.cmpi ne, %45, %c0_i32_27 : i32
    scf.if %46 {
      %47 = vector.shape_cast %42 : vector<32x32xf32> to vector<2x16x32xf32>
      %cst_28 = arith.constant dense<0.000000e+00> : vector<2x32xf32>
      %48 = vector.multi_reduction <add>, %47, %cst_28 [1] : vector<2x16x32xf32> to vector<2x32xf32>
      %c0_29 = arith.constant 0 : index
      %c0_30 = arith.constant 0 : index
      %49 = vector.load %arg3[%c0_29, %c0_30] : memref<2x1xf32, #tpu.memory_space<vmem>>, vector<2x1xf32>
      %50 = vector.broadcast %49 : vector<2x1xf32> to vector<2x32xf32>
      %51 = arith.mulf %48, %50 : vector<2x32xf32>
      %52 = arith.truncf %51 : vector<2x32xf32> to vector<2x32xbf16>
      %c0_31 = arith.constant 0 : index
      %c0_32 = arith.constant 0 : index
      %53 = vector.load %arg13[%c0_31, %c0_32] : memref<32x128xbf16, #tpu.memory_space<vmem>>, vector<32x128xbf16>
      %cst_33 = arith.constant dense<0.000000e+00> : vector<2x128xf32>
      %54 = tpu.matmul %52, %53, %cst_33 {dimension_numbers = #tpu.dot_dimension_numbers<[1], [0], [0], [1], [0, 0, 1, 1], [], []>} : vector<2x32xbf16>, vector<32x128xbf16>, vector<2x128xf32> -> vector<2x128xf32>
      %c0_34 = arith.constant 0 : index
      %c0_35 = arith.constant 0 : index
      %55 = vector.load %arg14[%c0_34, %c0_35] : memref<1x128xf32, #tpu.memory_space<vmem>>, vector<1x128xf32>
      %56 = vector.broadcast %55 : vector<1x128xf32> to vector<2x128xf32>
      %57 = arith.addf %54, %56 : vector<2x128xf32>
      %c0_36 = arith.constant 0 : index
      %c0_37 = arith.constant 0 : index
      %58 = vector.load %arg15[%c0_36, %c0_37] : memref<2x128xf32, #tpu.memory_space<vmem>>, vector<2x128xf32>
      tpu.vector_store %arg15[%c0_36, %c0_37], %57 {strides = array<i32>} : memref<2x128xf32, #tpu.memory_space<vmem>>, vector<2x128xf32>,
    } else {
    }
    return
  }
  func.func @transform_0(%arg0: i32, %arg1: i32) -> (i32, i32, i32) {
    %c0_i32 = arith.constant 0 : i32
    %c0_i32_0 = arith.constant 0 : i32
    %c0_i32_1 = arith.constant 0 : i32
    return %arg0, %c0_i32, %c0_i32_0 : i32, i32, i32
  }
  func.func @transform_1(%arg0: i32, %arg1: i32) -> (i32, i32) {
    %c0_i32 = arith.constant 0 : i32
    %c0_i32_0 = arith.constant 0 : i32
    return %arg0, %c0_i32 : i32, i32
  }
  func.func @transform_2(%arg0: i32, %arg1: i32) -> (i32, i32) {
    %c0_i32 = arith.constant 0 : i32
    %c0_i32_0 = arith.constant 0 : i32
    %c0_i32_1 = arith.constant 0 : i32
    return %c0_i32, %c0_i32_0 : i32, i32
  }
  func.func @transform_3(%arg0: i32, %arg1: i32) -> (i32, i32) {
    %c0_i32 = arith.constant 0 : i32
    %c0_i32_0 = arith.constant 0 : i32
    %c0_i32_1 = arith.constant 0 : i32
    return %c0_i32, %c0_i32_0 : i32, i32
  }
  func.func @transform_4(%arg0: i32, %arg1: i32) -> (i32, i32) {
    %c0_i32 = arith.constant 0 : i32
    %c0_i32_0 = arith.constant 0 : i32
    %c0_i32_1 = arith.constant 0 : i32
    return %c0_i32, %c0_i32_0 : i32, i32
  }
  func.func @transform_5(%arg0: i32, %arg1: i32) -> (i32, i32) {
    %c0_i32 = arith.constant 0 : i32
    %c0_i32_0 = arith.constant 0 : i32
    %c0_i32_1 = arith.constant 0 : i32
    return %c0_i32, %c0_i32_0 : i32, i32
  }
  func.func @transform_6(%arg0: i32, %arg1: i32) -> (i32, i32) {
    %c0_i32 = arith.constant 0 : i32
    %c0_i32_0 = arith.constant 0 : i32
    %c0_i32_1 = arith.constant 0 : i32
    return %c0_i32, %c0_i32_0 : i32, i32
  }
  func.func @transform_7(%arg0: i32, %arg1: i32) -> (i32, i32, i32) {
    %c0_i32 = arith.constant 0 : i32
    %c0_i32_0 = arith.constant 0 : i32
    %c0_i32_1 = arith.constant 0 : i32
    return %arg1, %c0_i32, %c0_i32_0 : i32, i32, i32
  }
  func.func @transform_8(%arg0: i32, %arg1: i32) -> (i32, i32, i32) {
    %c0_i32 = arith.constant 0 : i32
    %c0_i32_0 = arith.constant 0 : i32
    %c0_i32_1 = arith.constant 0 : i32
    return %arg1, %c0_i32, %c0_i32_0 : i32, i32, i32
  }
  func.func @transform_9(%arg0: i32, %arg1: i32) -> (i32, i32, i32) {
    %c0_i32 = arith.constant 0 : i32
    %c0_i32_0 = arith.constant 0 : i32
    %c0_i32_1 = arith.constant 0 : i32
    return %arg1, %c0_i32, %c0_i32_0 : i32, i32, i32
  }
  func.func @transform_10(%arg0: i32, %arg1: i32) -> (i32, i32, i32) {
    %c0_i32 = arith.constant 0 : i32
    %c0_i32_0 = arith.constant 0 : i32
    %c0_i32_1 = arith.constant 0 : i32
    return %arg1, %c0_i32, %c0_i32_0 : i32, i32, i32
  }
  func.func @transform_11(%arg0: i32, %arg1: i32) -> (i32, i32) {
    %c0_i32 = arith.constant 0 : i32
    %c0_i32_0 = arith.constant 0 : i32
    %c0_i32_1 = arith.constant 0 : i32
    return %c0_i32, %c0_i32_0 : i32, i32
  }
  func.func @transform_12(%arg0: i32, %arg1: i32) -> (i32, i32) {
    %c0_i32 = arith.constant 0 : i32
    %c0_i32_0 = arith.constant 0 : i32
    %c0_i32_1 = arith.constant 0 : i32
    return %c0_i32, %c0_i32_0 : i32, i32
  }
  func.func @transform_13(%arg0: i32, %arg1: i32) -> (i32, i32) {
    %c0_i32 = arith.constant 0 : i32
    %c0_i32_0 = arith.constant 0 : i32
    return %arg0, %c0_i32 : i32, i32
  }
}

</mosaic_0001>

<llo_original>
// kernel: tpu_custom_call.1
$region0: #{tpu_custom_call.1}
  #allocation0 [shape = 'u32[]', space=smem, size = 0x4, offset = 0x4, fixed_abs, tag = 'smem constant byte address 0x4 - core index']
  #allocation1 [shape = 'u32[144,128]{1,0:T(1,128)}', space=vmem, size = 0x12000, scoped, tag = 'internal scratch']
  #allocation2 [shape = 'f32[32,32]{1,0:T(8,128)}', space=vmem, size = 0x4000, scoped, tag = 'scratch operand']
  %s0 = inlined_call_operand.hbm [shape: bf16[2,16,32], index: 0, kind: input, shape index: {}]
  %s1 = inlined_call_operand.vmem [shape: f32[2,1], index: 1, kind: input, shape index: {}]
  %s2 = inlined_call_operand.vmem [shape: f32[32,1], index: 2, kind: input, shape index: {}]
  %s3 = inlined_call_operand.vmem [shape: f32[32,1], index: 3, kind: input, shape index: {}]
  %s4 = inlined_call_operand.vmem [shape: f32[32,1], index: 4, kind: input, shape index: {}]
  %s5 = inlined_call_operand.vmem [shape: bf16[32,32], index: 5, kind: input, shape index: {}]
  %s6 = inlined_call_operand.vmem [shape: f32[1,32], index: 6, kind: input, shape index: {}]
  %s7 = inlined_call_operand.vmem [shape: bf16[2,32,64], index: 7, kind: input, shape index: {}]
  %s8 = inlined_call_operand.vmem [shape: bf16[2,32,64], index: 8, kind: input, shape index: {}]
  %s9 = inlined_call_operand.vmem [shape: bf16[2,32,64], index: 9, kind: input, shape index: {}]
  %s10 = inlined_call_operand.vmem [shape: f32[2,1,64], index: 10, kind: input, shape index: {}]
  %s11 = inlined_call_operand.vmem [shape: bf16[32,128], index: 11, kind: input, shape index: {}]
  %s12 = inlined_call_operand.vmem [shape: f32[1,128], index: 12, kind: input, shape index: {}]
  %s13 = inlined_call_operand.hbm [shape: f32[2,128], index: 13, kind: output, shape index: {}]
  %s14 = sld [smem:[#allocation0]]
  $region97: #{tpu_custom_call.1} parent=0
    _
  %s16 = ssub.s32 1, %s14
  %s17 = scalar_select 0, %s16, %s14
  $region1: #{tpu_custom_call.1} parent=0
    #allocation3 [shape = 'u8[8192]{0}', space=vmem, size = 0x2000, scoped, tag = 'input window, operand 0, single buffered']
    #allocation4 [shape = 's32[2]{0}', space=sflag, size = 0x8, scoped, tag = 'scoped memory for tpu_custom_call.1']
    #allocation5 [shape = 's32[2]{0}', space=sflag, size = 0x8, scoped, tag = 'scoped memory for tpu_custom_call.1']
    #allocation6 [shape = 'u8[1024]{0}', space=vmem, size = 0x400, scoped, tag = 'output window, operand 0, single buffered']
    %18 = vsyncpa [#allocation4], 0
    %19 = vsyncpa [#allocation5], 0
    loop: start=0, step=1, limit=4
    $region2: #{tpu_custom_call.1} parent=1 // loop_pre_header
      _
    $region3: #{tpu_custom_call.1} parent=1 // loop_header
      %s21 = sphi 0, %s25
      %p22 = scmp.ge.s32.totalorder %s21, 4
      %s28 = sphi 0, %s40
      %s29 = sphi 0, %s36
      %s30 = sphi 0, %s28
      %s31 = sphi 0, %s29
      %s32 = sphi 0, %s30
      %s33 = sphi 0, %s31
      %s43 = sphi 0, %s45
      %s46 = sphi 0, %s43
      %s47 = sphi 0, %s46
      %s63 = sphi 0, %s47
      %s69 = sphi 0, %s71
      %s72 = sphi 0, %s69
      %s73 = sphi 0, %s72
      %s89 = sphi 0, %s73
      %s93 = sphi 0, %s93
      %s95 = sphi 0, %s93
      %s96 = sphi 0, %s95
      %s110 = sphi 0, %s96
      %s114 = sphi 0, %s114
      %s116 = sphi 0, %s114
      %s117 = sphi 0, %s116
      %s131 = sphi 0, %s117
      %s135 = sphi 0, %s135
      %s137 = sphi 0, %s135
      %s138 = sphi 0, %s137
      %s152 = sphi 0, %s138
      %s156 = sphi 0, %s156
      %s158 = sphi 0, %s156
      %s159 = sphi 0, %s158
      %s173 = sphi 0, %s159
      %s177 = sphi 0, %s177
      %s179 = sphi 0, %s177
      %s180 = sphi 0, %s179
      %s194 = sphi 0, %s180
      %s200 = sphi 0, %s202
      %s203 = sphi 0, %s200
      %s204 = sphi 0, %s203
      %s220 = sphi 0, %s204
      %s226 = sphi 0, %s228
      %s229 = sphi 0, %s226
      %s230 = sphi 0, %s229
      %s246 = sphi 0, %s230
      %s252 = sphi 0, %s254
      %s255 = sphi 0, %s252
      %s256 = sphi 0, %s255
      %s272 = sphi 0, %s256
      %s278 = sphi 0, %s280
      %s281 = sphi 0, %s278
      %s282 = sphi 0, %s281
      %s298 = sphi 0, %s282
      %s302 = sphi 0, %s302
      %s304 = sphi 0, %s302
      %s305 = sphi 0, %s304
      %s319 = sphi 0, %s305
      %s323 = sphi 0, %s323
      %s325 = sphi 0, %s323
      %s326 = sphi 0, %s325
      %s340 = sphi 0, %s326
      %s346 = sphi 0, %s348
      %s349 = sphi 0, %s346
      %s350 = sphi 0, %s349
      %s366 = sphi 0, %s350
    $region4: #{tpu_custom_call.1} parent=1 // loop_header_branch
      %24 = sbr.rel (%p22) target = $region8
    $region5: #{tpu_custom_call.1} parent=1 // loop_body
      %s26 = ssub.s32 %s21, 1
      %s27 = ssub.s32 %s21, 2
      %s34 = sadd.s32 1, %s29
      %p35 = scmp.ge.s32.totalorder %s34, 2
      %s36 = scalar_select %p35, 0, %s34
      %s37 = sadd.s32 1, %s28
      %s38 = scalar_select %p35, %s37, %s28
      %p39 = scmp.ge.s32.totalorder %s38, 1
      %s40 = scalar_select %p39, 0, %s38
      %s41 = ssub.s32 %s28, %s40
      %p42 = scmp.eq.s32.totalorder %s41, 0
      %s44 = sadd.s32 %s43, 1
      %s45 = scalar_select %p42, %s43, %s44
      %p48 = pneg %p42
      %p49 = scmp.eq.s32.totalorder %s21, 1
      %p50 = por %p48, %p49
      %p51 = scmp.ne.s32.totalorder %s43, %s46
      %p52 = scmp.eq.s32.totalorder %s21, 0
      %p53 = por %p51, %p52
      %p54 = scmp.ne.s32.totalorder %s43, %s46
      %p55 = scmp.eq.s32.totalorder %s26, 1
      %p56 = por %p54, %p55
      %p57 = scmp.ne.s32.totalorder %s46, %s47
      %p58 = scmp.eq.s32.totalorder %s26, 0
      %p59 = por %p57, %p58
      %p60 = scmp.ne.s32.totalorder %s46, %s47
      %p61 = scmp.eq.s32.totalorder %s27, 1
      %p62 = por %p60, %p61
      %p64 = scmp.ne.s32.totalorder %s47, %s63
      %p65 = scmp.eq.s32.totalorder %s27, 0
      %p66 = por %p64, %p65
      %s67 = ssub.s32 %s28, %s40
      %p68 = scmp.eq.s32.totalorder %s67, 0
      %s70 = sadd.s32 %s69, 1
      %s71 = scalar_select %p68, %s69, %s70
      %p74 = pneg %p68
      %p75 = scmp.eq.s32.totalorder %s21, 1
      %p76 = por %p74, %p75
      %p77 = scmp.ne.s32.totalorder %s69, %s72
      %p78 = scmp.eq.s32.totalorder %s21, 0
      %p79 = por %p77, %p78
      %p80 = scmp.ne.s32.totalorder %s69, %s72
      %p81 = scmp.eq.s32.totalorder %s26, 1
      %p82 = por %p80, %p81
      %p83 = scmp.ne.s32.totalorder %s72, %s73
      %p84 = scmp.eq.s32.totalorder %s26, 0
      %p85 = por %p83, %p84
      %p86 = scmp.ne.s32.totalorder %s72, %s73
      %p87 = scmp.eq.s32.totalorder %s27, 1
      %p88 = por %p86, %p87
      %p90 = scmp.ne.s32.totalorder %s73, %s89
      %p91 = scmp.eq.s32.totalorder %s27, 0
      %p92 = por %p90, %p91
      %s94 = sadd.s32 %s93, 1
      %p97 = scmp.eq.s32.totalorder %s21, 1
      %p98 = scmp.ne.s32.totalorder %s93, %s95
      %p99 = scmp.eq.s32.totalorder %s21, 0
      %p100 = por %p98, %p99
      %p101 = scmp.ne.s32.totalorder %s93, %s95
      %p102 = scmp.eq.s32.totalorder %s26, 1
      %p103 = por %p101, %p102
      %p104 = scmp.ne.s32.totalorder %s95, %s96
      %p105 = scmp.eq.s32.totalorder %s26, 0
      %p106 = por %p104, %p105
      %p107 = scmp.ne.s32.totalorder %s95, %s96
      %p108 = scmp.eq.s32.totalorder %s27, 1
      %p109 = por %p107, %p108
      %p111 = scmp.ne.s32.totalorder %s96, %s110
      %p112 = scmp.eq.s32.totalorder %s27, 0
      %p113 = por %p111, %p112
      %s115 = sadd.s32 %s114, 1
      %p118 = scmp.eq.s32.totalorder %s21, 1
      %p119 = scmp.ne.s32.totalorder %s114, %s116
      %p120 = scmp.eq.s32.totalorder %s21, 0
      %p121 = por %p119, %p120
      %p122 = scmp.ne.s32.totalorder %s114, %s116
      %p123 = scmp.eq.s32.totalorder %s26, 1
      %p124 = por %p122, %p123
      %p125 = scmp.ne.s32.totalorder %s116, %s117
      %p126 = scmp.eq.s32.totalorder %s26, 0
      %p127 = por %p125, %p126
      %p128 = scmp.ne.s32.totalorder %s116, %s117
      %p129 = scmp.eq.s32.totalorder %s27, 1
      %p130 = por %p128, %p129
      %p132 = scmp.ne.s32.totalorder %s117, %s131
      %p133 = scmp.eq.s32.totalorder %s27, 0
      %p134 = por %p132, %p133
      %s136 = sadd.s32 %s135, 1
      %p139 = scmp.eq.s32.totalorder %s21, 1
      %p140 = scmp.ne.s32.totalorder %s135, %s137
      %p141 = scmp.eq.s32.totalorder %s21, 0
      %p142 = por %p140, %p141
      %p143 = scmp.ne.s32.totalorder %s135, %s137
      %p144 = scmp.eq.s32.totalorder %s26, 1
      %p145 = por %p143, %p144
      %p146 = scmp.ne.s32.totalorder %s137, %s138
      %p147 = scmp.eq.s32.totalorder %s26, 0
      %p148 = por %p146, %p147
      %p149 = scmp.ne.s32.totalorder %s137, %s138
      %p150 = scmp.eq.s32.totalorder %s27, 1
      %p151 = por %p149, %p150
      %p153 = scmp.ne.s32.totalorder %s138, %s152
      %p154 = scmp.eq.s32.totalorder %s27, 0
      %p155 = por %p153, %p154
      %s157 = sadd.s32 %s156, 1
      %p160 = scmp.eq.s32.totalorder %s21, 1
      %p161 = scmp.ne.s32.totalorder %s156, %s158
      %p162 = scmp.eq.s32.totalorder %s21, 0
      %p163 = por %p161, %p162
      %p164 = scmp.ne.s32.totalorder %s156, %s158
      %p165 = scmp.eq.s32.totalorder %s26, 1
      %p166 = por %p164, %p165
      %p167 = scmp.ne.s32.totalorder %s158, %s159
      %p168 = scmp.eq.s32.totalorder %s26, 0
      %p169 = por %p167, %p168
      %p170 = scmp.ne.s32.totalorder %s158, %s159
      %p171 = scmp.eq.s32.totalorder %s27, 1
      %p172 = por %p170, %p171
      %p174 = scmp.ne.s32.totalorder %s159, %s173
      %p175 = scmp.eq.s32.totalorder %s27, 0
      %p176 = por %p174, %p175
      %s178 = sadd.s32 %s177, 1
      %p181 = scmp.eq.s32.totalorder %s21, 1
      %p182 = scmp.ne.s32.totalorder %s177, %s179
      %p183 = scmp.eq.s32.totalorder %s21, 0
      %p184 = por %p182, %p183
      %p185 = scmp.ne.s32.totalorder %s177, %s179
      %p186 = scmp.eq.s32.totalorder %s26, 1
      %p187 = por %p185, %p186
      %p188 = scmp.ne.s32.totalorder %s179, %s180
      %p189 = scmp.eq.s32.totalorder %s26, 0
      %p190 = por %p188, %p189
      %p191 = scmp.ne.s32.totalorder %s179, %s180
      %p192 = scmp.eq.s32.totalorder %s27, 1
      %p193 = por %p191, %p192
      %p195 = scmp.ne.s32.totalorder %s180, %s194
      %p196 = scmp.eq.s32.totalorder %s27, 0
      %p197 = por %p195, %p196
      %s198 = ssub.s32 %s29, %s36
      %p199 = scmp.eq.s32.totalorder %s198, 0
      %s201 = sadd.s32 %s200, 1
      %s202 = scalar_select %p199, %s200, %s201
      %p205 = pneg %p199
      %p206 = scmp.eq.s32.totalorder %s21, 1
      %p207 = por %p205, %p206
      %p208 = scmp.ne.s32.totalorder %s200, %s203
      %p209 = scmp.eq.s32.totalorder %s21, 0
      %p210 = por %p208, %p209
      %p211 = scmp.ne.s32.totalorder %s200, %s203
      %p212 = scmp.eq.s32.totalorder %s26, 1
      %p213 = por %p211, %p212
      %p214 = scmp.ne.s32.totalorder %s203, %s204
      %p215 = scmp.eq.s32.totalorder %s26, 0
      %p216 = por %p214, %p215
      %p217 = scmp.ne.s32.totalorder %s203, %s204
      %p218 = scmp.eq.s32.totalorder %s27, 1
      %p219 = por %p217, %p218
      %p221 = scmp.ne.s32.totalorder %s204, %s220
      %p222 = scmp.eq.s32.totalorder %s27, 0
      %p223 = por %p221, %p222
      %s224 = ssub.s32 %s29, %s36
      %p225 = scmp.eq.s32.totalorder %s224, 0
      %s227 = sadd.s32 %s226, 1
      %s228 = scalar_select %p225, %s226, %s227
      %p231 = pneg %p225
      %p232 = scmp.eq.s32.totalorder %s21, 1
      %p233 = por %p231, %p232
      %p234 = scmp.ne.s32.totalorder %s226, %s229
      %p235 = scmp.eq.s32.totalorder %s21, 0
      %p236 = por %p234, %p235
      %p237 = scmp.ne.s32.totalorder %s226, %s229
      %p238 = scmp.eq.s32.totalorder %s26, 1
      %p239 = por %p237, %p238
      %p240 = scmp.ne.s32.totalorder %s229, %s230
      %p241 = scmp.eq.s32.totalorder %s26, 0
      %p242 = por %p240, %p241
      %p243 = scmp.ne.s32.totalorder %s229, %s230
      %p244 = scmp.eq.s32.totalorder %s27, 1
      %p245 = por %p243, %p244
      %p247 = scmp.ne.s32.totalorder %s230, %s246
      %p248 = scmp.eq.s32.totalorder %s27, 0
      %p249 = por %p247, %p248
      %s250 = ssub.s32 %s29, %s36
      %p251 = scmp.eq.s32.totalorder %s250, 0
      %s253 = sadd.s32 %s252, 1
      %s254 = scalar_select %p251, %s252, %s253
      %p257 = pneg %p251
      %p258 = scmp.eq.s32.totalorder %s21, 1
      %p259 = por %p257, %p258
      %p260 = scmp.ne.s32.totalorder %s252, %s255
      %p261 = scmp.eq.s32.totalorder %s21, 0
      %p262 = por %p260, %p261
      %p263 = scmp.ne.s32.totalorder %s252, %s255
      %p264 = scmp.eq.s32.totalorder %s26, 1
      %p265 = por %p263, %p264
      %p266 = scmp.ne.s32.totalorder %s255, %s256
      %p267 = scmp.eq.s32.totalorder %s26, 0
      %p268 = por %p266, %p267
      %p269 = scmp.ne.s32.totalorder %s255, %s256
      %p270 = scmp.eq.s32.totalorder %s27, 1
      %p271 = por %p269, %p270
      %p273 = scmp.ne.s32.totalorder %s256, %s272
      %p274 = scmp.eq.s32.totalorder %s27, 0
      %p275 = por %p273, %p274
      %s276 = ssub.s32 %s29, %s36
      %p277 = scmp.eq.s32.totalorder %s276, 0
      %s279 = sadd.s32 %s278, 1
      %s280 = scalar_select %p277, %s278, %s279
      %p283 = pneg %p277
      %p284 = scmp.eq.s32.totalorder %s21, 1
      %p285 = por %p283, %p284
      %p286 = scmp.ne.s32.totalorder %s278, %s281
      %p287 = scmp.eq.s32.totalorder %s21, 0
      %p288 = por %p286, %p287
      %p289 = scmp.ne.s32.totalorder %s278, %s281
      %p290 = scmp.eq.s32.totalorder %s26, 1
      %p291 = por %p289, %p290
      %p292 = scmp.ne.s32.totalorder %s281, %s282
      %p293 = scmp.eq.s32.totalorder %s26, 0
      %p294 = por %p292, %p293
      %p295 = scmp.ne.s32.totalorder %s281, %s282
      %p296 = scmp.eq.s32.totalorder %s27, 1
      %p297 = por %p295, %p296
      %p299 = scmp.ne.s32.totalorder %s282, %s298
      %p300 = scmp.eq.s32.totalorder %s27, 0
      %p301 = por %p299, %p300
      %s303 = sadd.s32 %s302, 1
      %p306 = scmp.eq.s32.totalorder %s21, 1
      %p307 = scmp.ne.s32.totalorder %s302, %s304
      %p308 = scmp.eq.s32.totalorder %s21, 0
      %p309 = por %p307, %p308
      %p310 = scmp.ne.s32.totalorder %s302, %s304
      %p311 = scmp.eq.s32.totalorder %s26, 1
      %p312 = por %p310, %p311
      %p313 = scmp.ne.s32.totalorder %s304, %s305
      %p314 = scmp.eq.s32.totalorder %s26, 0
      %p315 = por %p313, %p314
      %p316 = scmp.ne.s32.totalorder %s304, %s305
      %p317 = scmp.eq.s32.totalorder %s27, 1
      %p318 = por %p316, %p317
      %p320 = scmp.ne.s32.totalorder %s305, %s319
      %p321 = scmp.eq.s32.totalorder %s27, 0
      %p322 = por %p320, %p321
      %s324 = sadd.s32 %s323, 1
      %p327 = scmp.eq.s32.totalorder %s21, 1
      %p328 = scmp.ne.s32.totalorder %s323, %s325
      %p329 = scmp.eq.s32.totalorder %s21, 0
      %p330 = por %p328, %p329
      %p331 = scmp.ne.s32.totalorder %s323, %s325
      %p332 = scmp.eq.s32.totalorder %s26, 1
      %p333 = por %p331, %p332
      %p334 = scmp.ne.s32.totalorder %s325, %s326
      %p335 = scmp.eq.s32.totalorder %s26, 0
      %p336 = por %p334, %p335
      %p337 = scmp.ne.s32.totalorder %s325, %s326
      %p338 = scmp.eq.s32.totalorder %s27, 1
      %p339 = por %p337, %p338
      %p341 = scmp.ne.s32.totalorder %s326, %s340
      %p342 = scmp.eq.s32.totalorder %s27, 0
      %p343 = por %p341, %p342
      %s344 = ssub.s32 %s28, %s40
      %p345 = scmp.eq.s32.totalorder %s344, 0
      %s347 = sadd.s32 %s346, 1
      %s348 = scalar_select %p345, %s346, %s347
      %p351 = pneg %p345
      %p352 = scmp.eq.s32.totalorder %s21, 1
      %p353 = por %p351, %p352
      %p354 = scmp.ne.s32.totalorder %s346, %s349
      %p355 = scmp.eq.s32.totalorder %s21, 0
      %p356 = por %p354, %p355
      %p357 = scmp.ne.s32.totalorder %s346, %s349
      %p358 = scmp.eq.s32.totalorder %s26, 1
      %p359 = por %p357, %p358
      %p360 = scmp.ne.s32.totalorder %s349, %s350
      %p361 = scmp.eq.s32.totalorder %s26, 0
      %p362 = por %p360, %p361
      %p363 = scmp.ne.s32.totalorder %s349, %s350
      %p364 = scmp.eq.s32.totalorder %s27, 1
      %p365 = por %p363, %p364
      %p367 = scmp.ne.s32.totalorder %s350, %s366
      %p368 = scmp.eq.s32.totalorder %s27, 0
      %p369 = por %p367, %p368
      %p370 = scmp.le.s32.totalorder 1, %s21
      %p371 = scmp.lt.s32.totalorder %s21, 3
      %p372 = pnand %p370, %p371
      %p373 = pneg %p372
      // Predicated region
      $region9: #{tpu_custom_call.1} parent=5 // pred_check
        _
      $region10: #{tpu_custom_call.1} parent=5 // pred_check_branch
        %375 = sbr.rel (%p372) target = $region12
      $region11: #{tpu_custom_call.1} parent=5 // pred_region
        %s376 = ssub.s32 %s21, 1
        // Predicated region
        $region13: #{tpu_custom_call.1} parent=11 // pred_check
          %p377 = pneg %p59
        $region14: #{tpu_custom_call.1} parent=11 // pred_check_branch
          %379 = sbr.rel (%p377) target = $region16
        $region15: #{tpu_custom_call.1} parent=11 // pred_region
          %s380 = smul.u32 2, %s30
          %s382 = ssub.s32 256, 256
          %383 = vsyncadd [#allocation4], %s382
          %s384 = smul.addr %s380, 2
          %s385 = smul.addr %s384, 64
          %s386 = scalar_lea.hbm %s0, %s385
          %s387 = sshll.u32 [#allocation3], 4
          %s388 = int_to_ptr.vmem [resolvable:$true] %s387
          %393 = dma.hbm_to_vmem [thread:$0]  %s386, 256, %s388, [#allocation4], 64, 64, 4
        $region16: #{tpu_custom_call.1} parent=11 // pred_fallthru
          _
        // Predicated region
        $region17: #{tpu_custom_call.1} parent=11 // pred_check
          %p394 = pneg %p85
        $region18: #{tpu_custom_call.1} parent=11 // pred_check_branch
          %396 = sbr.rel (%p394) target = $region20
        $region19: #{tpu_custom_call.1} parent=11 // pred_region
          %p397 = scmp.lt.s32.totalorder %s30, 0
          %s398 = scalar_select %p397, %s30, 0
          %s399 = smul.addr %s398, 2
          %s400 = scalar_lea.vmem %s1, %s399
        $region20: #{tpu_custom_call.1} parent=11 // pred_fallthru
          _
        // Predicated region
        $region21: #{tpu_custom_call.1} parent=11 // pred_check
          %p401 = pneg %p106
        $region22: #{tpu_custom_call.1} parent=11 // pred_check_branch
          %403 = sbr.rel (%p401) target = $region24
        $region23: #{tpu_custom_call.1} parent=11 // pred_region
          _
        $region24: #{tpu_custom_call.1} parent=11 // pred_fallthru
          _
        // Predicated region
        $region25: #{tpu_custom_call.1} parent=11 // pred_check
          %p404 = pneg %p127
        $region26: #{tpu_custom_call.1} parent=11 // pred_check_branch
          %406 = sbr.rel (%p404) target = $region28
        $region27: #{tpu_custom_call.1} parent=11 // pred_region
          _
        $region28: #{tpu_custom_call.1} parent=11 // pred_fallthru
          _
        // Predicated region
        $region29: #{tpu_custom_call.1} parent=11 // pred_check
          %p407 = pneg %p148
        $region30: #{tpu_custom_call.1} parent=11 // pred_check_branch
          %409 = sbr.rel (%p407) target = $region32
        $region31: #{tpu_custom_call.1} parent=11 // pred_region
          _
        $region32: #{tpu_custom_call.1} parent=11 // pred_fallthru
          _
        // Predicated region
        $region33: #{tpu_custom_call.1} parent=11 // pred_check
          %p410 = pneg %p169
        $region34: #{tpu_custom_call.1} parent=11 // pred_check_branch
          %412 = sbr.rel (%p410) target = $region36
        $region35: #{tpu_custom_call.1} parent=11 // pred_region
          _
        $region36: #{tpu_custom_call.1} parent=11 // pred_fallthru
          _
        // Predicated region
        $region37: #{tpu_custom_call.1} parent=11 // pred_check
          %p413 = pneg %p190
        $region38: #{tpu_custom_call.1} parent=11 // pred_check_branch
          %415 = sbr.rel (%p413) target = $region40
        $region39: #{tpu_custom_call.1} parent=11 // pred_region
          _
        $region40: #{tpu_custom_call.1} parent=11 // pred_fallthru
          _
        // Predicated region
        $region41: #{tpu_custom_call.1} parent=11 // pred_check
          %p416 = pneg %p315
        $region42: #{tpu_custom_call.1} parent=11 // pred_check_branch
          %418 = sbr.rel (%p416) target = $region44
        $region43: #{tpu_custom_call.1} parent=11 // pred_region
          _
        $region44: #{tpu_custom_call.1} parent=11 // pred_fallthru
          _
        // Predicated region
        $region45: #{tpu_custom_call.1} parent=11 // pred_check
          %p419 = pneg %p336
        $region46: #{tpu_custom_call.1} parent=11 // pred_check_branch
          %421 = sbr.rel (%p419) target = $region48
        $region47: #{tpu_custom_call.1} parent=11 // pred_region
          _
        $region48: #{tpu_custom_call.1} parent=11 // pred_fallthru
          _
      $region12: #{tpu_custom_call.1} parent=5 // pred_fallthru
        _
      %p422 = scmp.lt.s32.totalorder %s21, 2
      // Predicated region
      $region49: #{tpu_custom_call.1} parent=5 // pred_check
        %p423 = pneg %p422
      $region50: #{tpu_custom_call.1} parent=5 // pred_check_branch
        %425 = sbr.rel (%p423) target = $region52
      $region51: #{tpu_custom_call.1} parent=5 // pred_region
        // Predicated region
        $region53: #{tpu_custom_call.1} parent=51 // pred_check
          %p426 = pneg %p210
        $region54: #{tpu_custom_call.1} parent=51 // pred_check_branch
          %428 = sbr.rel (%p426) target = $region56
        $region55: #{tpu_custom_call.1} parent=51 // pred_region
          %p429 = scmp.lt.s32.totalorder %s29, 1
          %s430 = scalar_select %p429, %s29, 1
          %s431 = smul.addr %s430, 4
          %s432 = smul.addr %s431, 4
          %s433 = scalar_lea.vmem %s7, %s432
        $region56: #{tpu_custom_call.1} parent=51 // pred_fallthru
          _
        // Predicated region
        $region57: #{tpu_custom_call.1} parent=51 // pred_check
          %p434 = pneg %p236
        $region58: #{tpu_custom_call.1} parent=51 // pred_check_branch
          %436 = sbr.rel (%p434) target = $region60
        $region59: #{tpu_custom_call.1} parent=51 // pred_region
          %p437 = scmp.lt.s32.totalorder %s29, 1
          %s438 = scalar_select %p437, %s29, 1
          %s439 = smul.addr %s438, 4
          %s440 = smul.addr %s439, 4
          %s441 = scalar_lea.vmem %s8, %s440
        $region60: #{tpu_custom_call.1} parent=51 // pred_fallthru
          _
        // Predicated region
        $region61: #{tpu_custom_call.1} parent=51 // pred_check
          %p442 = pneg %p262
        $region62: #{tpu_custom_call.1} parent=51 // pred_check_branch
          %444 = sbr.rel (%p442) target = $region64
        $region63: #{tpu_custom_call.1} parent=51 // pred_region
          %p445 = scmp.lt.s32.totalorder %s29, 1
          %s446 = scalar_select %p445, %s29, 1
          %s447 = smul.addr %s446, 4
          %s448 = smul.addr %s447, 4
          %s449 = scalar_lea.vmem %s9, %s448
        $region64: #{tpu_custom_call.1} parent=51 // pred_fallthru
          _
        // Predicated region
        $region65: #{tpu_custom_call.1} parent=51 // pred_check
          %p450 = pneg %p288
        $region66: #{tpu_custom_call.1} parent=51 // pred_check_branch
          %452 = sbr.rel (%p450) target = $region68
        $region67: #{tpu_custom_call.1} parent=51 // pred_region
          %p453 = scmp.lt.s32.totalorder %s29, 1
          %s454 = scalar_select %p453, %s29, 1
          %s455 = scalar_lea.vmem %s10, %s454
        $region68: #{tpu_custom_call.1} parent=51 // pred_fallthru
          _
      $region52: #{tpu_custom_call.1} parent=5 // pred_fallthru
        _
      %p456 = scmp.le.s32.totalorder 1, %s21
      %p457 = scmp.lt.s32.totalorder %s21, 3
      %p458 = pnand %p456, %p457
      %p459 = pneg %p458
      // Predicated region
      $region69: #{tpu_custom_call.1} parent=5 // pred_check
        _
      $region70: #{tpu_custom_call.1} parent=5 // pred_check_branch
        %461 = sbr.rel (%p458) target = $region72
      $region71: #{tpu_custom_call.1} parent=5 // pred_region
        %s462 = ssub.s32 %s21, 1
        // Predicated region
        $region73: #{tpu_custom_call.1} parent=71 // pred_check
          %p463 = pneg %p59
        $region74: #{tpu_custom_call.1} parent=71 // pred_check_branch
          %465 = sbr.rel (%p463) target = $region76
        $region75: #{tpu_custom_call.1} parent=71 // pred_region
          %466 = dma.done [#allocation4], 256
        $region76: #{tpu_custom_call.1} parent=71 // pred_fallthru
          _
        %p467 = pneg %p59
        %p468 = pneg %p56
        %p469 = scmp.lt.s32.totalorder %s30, 0
        %s470 = scalar_select %p469, %s30, 0
        %s471 = smul.addr %s470, 2
        %s472 = scalar_lea.vmem %s1, %s471
        %p473 = pneg %p85
        %p474 = pneg %p82
        %p475 = pneg %p106
        %p476 = pneg %p103
        %p477 = pneg %p127
        %p478 = pneg %p124
        %p479 = pneg %p148
        %p480 = pneg %p145
        %p481 = pneg %p169
        %p482 = pneg %p166
        %p483 = pneg %p190
        %p484 = pneg %p187
        %p485 = scmp.lt.s32.totalorder %s31, 1
        %s486 = scalar_select %p485, %s31, 1
        %s487 = smul.addr %s486, 4
        %s488 = smul.addr %s487, 4
        %s489 = scalar_lea.vmem %s7, %s488
        %p490 = pneg %p216
        %p491 = pneg %p213
        %p492 = scmp.lt.s32.totalorder %s31, 1
        %s493 = scalar_select %p492, %s31, 1
        %s494 = smul.addr %s493, 4
        %s495 = smul.addr %s494, 4
        %s496 = scalar_lea.vmem %s8, %s495
        %p497 = pneg %p242
        %p498 = pneg %p239
        %p499 = scmp.lt.s32.totalorder %s31, 1
        %s500 = scalar_select %p499, %s31, 1
        %s501 = smul.addr %s500, 4
        %s502 = smul.addr %s501, 4
        %s503 = scalar_lea.vmem %s9, %s502
        %p504 = pneg %p268
        %p505 = pneg %p265
        %p506 = scmp.lt.s32.totalorder %s31, 1
        %s507 = scalar_select %p506, %s31, 1
        %s508 = scalar_lea.vmem %s10, %s507
        %p509 = pneg %p294
        %p510 = pneg %p291
        %p511 = pneg %p315
        %p512 = pneg %p312
        %p513 = pneg %p336
        %p514 = pneg %p333
        %p515 = pneg %p362
        %p516 = pneg %p359
        %s517 = smul.u32 2, %s30
        %p518 = scmp.lt.s32.totalorder %s30, 0
        %s519 = scalar_select %p518, %s30, 0
        %s520 = smul.addr %s519, 2
        %s521 = scalar_lea.vmem %s1, %s520
        %p522 = scmp.lt.s32.totalorder %s31, 1
        %s523 = scalar_select %p522, %s31, 1
        %s524 = smul.addr %s523, 4
        %s525 = smul.addr %s524, 4
        %s526 = scalar_lea.vmem %s7, %s525
        %p527 = scmp.lt.s32.totalorder %s31, 1
        %s528 = scalar_select %p527, %s31, 1
        %s529 = smul.addr %s528, 4
        %s530 = smul.addr %s529, 4
        %s531 = scalar_lea.vmem %s8, %s530
        %p532 = scmp.lt.s32.totalorder %s31, 1
        %s533 = scalar_select %p532, %s31, 1
        %s534 = smul.addr %s533, 4
        %s535 = smul.addr %s534, 4
        %s536 = scalar_lea.vmem %s9, %s535
        %p537 = scmp.lt.s32.totalorder %s31, 1
        %s538 = scalar_select %p537, %s31, 1
        %s539 = scalar_lea.vmem %s10, %s538
        %p541 = scmp.eq.s32.totalorder %s31, 0
        // Predicated region
        $region77: #{tpu_custom_call.1} parent=71 // pred_check
          %p542 = pneg %p541
        $region78: #{tpu_custom_call.1} parent=71 // pred_check_branch
          %544 = sbr.rel (%p542) target = $region80
        $region79: #{tpu_custom_call.1} parent=71 // pred_region
          %v545 = vld [vmem:[#allocation3] sm:$0xf]
          %v546 = vld [vmem:[#allocation3 + $0x4] sm:$0xf]
          %v547 = vld [vmem:[#allocation3 + $0x8] sm:$0xf]
          %v548 = vld [vmem:[#allocation3 + $0xc] sm:$0xf]
          %v549 = vld [vmem:[%s5] sm:$0xf]
          %v550 = vld [vmem:[%s5 + $0x4] sm:$0xf]
          %v551 = vld [vmem:[%s5 + $0x8] sm:$0xf]
          %v552 = vld [vmem:[%s5 + $0xc] sm:$0xf]
          %v553 = vld [vmem:[%s6] sm:$0x1]
          %v555 = vlaneseq
          %v556 = vshrl.u32 %v555, 7
          %v557 = vsub.s32 0, %v556
          %v558 = vrot.slane %v553, %v557
          %v564 = vunpack.c.l.b16 %v545
          %v565 = vunpack.c.l.b16 %v546
          %v566 = vunpack.c.l.b16 %v547
          %v567 = vunpack.c.l.b16 %v548
          %v568 = vpack.c.b16 %v565, %v564
          %v569 = vpack.c.b16 %v567, %v566
          %v574 = vunpack.c.l.b16 %v549
          %v575 = vunpack.c.l.b16 %v550
          %v576 = vunpack.c.l.b16 %v551
          %v577 = vunpack.c.l.b16 %v552
          %v578 = vpack.c.b16 %v575, %v574
          %v579 = vpack.c.b16 %v577, %v576
          %vm582 = vcmask 261120
          %v584 = vsel %vm582, %v568, 0
          %v587 = vsel %vm582, %v569, 0
          %589 = vmatprep.subr.bf16.mxu0 0
          %590 = vmatpush1.bf16.msra.mxu0 %v578
          %591 = vmatprep.subr.bf16.mxu0 0
          %592 = vmatpush1.bf16.msra.mxu0 %v579
          %593 = vmatprep.subr.bf16.mxu0 0
          %594 = vmatpush1.bf16.msra.mxu0 0
          %595 = vmatprep.subr.bf16.mxu0 0
          %596 = vmatpush1.bf16.msra.mxu0 0
          %597 = vmatprep.subr.bf16.mxu0 0
          %598 = vmatpush1.bf16.msra.mxu0 0
          %599 = vmatprep.subr.bf16.mxu0 0
          %600 = vmatpush1.bf16.msra.mxu0 0
          %601 = vmatprep.subr.bf16.mxu0 0
          %602 = vmatpush1.bf16.msra.mxu0 0
          %603 = vmatprep.subr.bf16.mxu0 0
          %604 = vmatpush1.bf16.msra.mxu0 0
          %605 = vmatprep.subr.bf16.mxu0 0
          %606 = vmatpush1.bf16.msra.mxu0 0
          %607 = vmatprep.subr.bf16.mxu0 0
          %608 = vmatpush1.bf16.msra.mxu0 0
          %609 = vmatprep.subr.bf16.mxu0 0
          %610 = vmatpush1.bf16.msra.mxu0 0
          %611 = vmatprep.subr.bf16.mxu0 0
          %612 = vmatpush1.bf16.msra.mxu0 0
          %613 = vmatprep.subr.bf16.mxu0 0
          %614 = vmatpush1.bf16.msra.mxu0 0
          %615 = vmatprep.subr.bf16.mxu0 0
          %616 = vmatpush1.bf16.msra.mxu0 0
          %617 = vmatprep.subr.bf16.mxu0 0
          %618 = vmatpush1.bf16.msra.mxu0 0
          %619 = vmatprep.subr.bf16.mxu0 0
          %620 = vmatpush1.bf16.msra.mxu0 0
          %621 = vmatprep.mubr.bf16.mxu0 0
          %622 = vmatmul.mubr.bf16.gmra.mrb[0].mxu0 %v584
          %v623 = vpop.f32.mrb[0].mxu0
          %v624 = vadd.f32 %v558, %v623
          %v625 = vpop.f32.mrb[0].mxu0
          %v626 = vpop.f32.mrb[0].mxu0
          %v627 = vadd.f32 %v558, %v626
          %v628 = vpop.f32.mrb[0].mxu0
          %629 = vmatprep.mubr.bf16.mxu0 0
          %630 = vmatmul.mubr.bf16.gmra.mrb[0].mxu0 %v587
          %v631 = vpop.f32.mrb[0].mxu0
          %v632 = vadd.f32 %v558, %v631
          %v633 = vpop.f32.mrb[0].mxu0
          %v634 = vpop.f32.mrb[0].mxu0
          %v635 = vadd.f32 %v558, %v634
          %v636 = vpop.f32.mrb[0].mxu0
          %637 = vdwg.mxu0
          %638 = vst.msk [vmem:[#allocation2] sm:$0xff] %vm582, %v624
          %639 = vst.msk [vmem:[#allocation2 + $0x8] sm:$0xff] %vm582, %v627
          %640 = vst.msk [vmem:[#allocation2 + $0x10] sm:$0xff] %vm582, %v632
          %641 = vst.msk [vmem:[#allocation2 + $0x18] sm:$0xff] %vm582, %v635
        $region80: #{tpu_custom_call.1} parent=71 // pred_fallthru
          _
        %v642 = vld [vmem:[#allocation2] sm:$0xff]
        %v643 = vld [vmem:[#allocation2 + $0x8] sm:$0xff]
        %v644 = vld [vmem:[#allocation2 + $0x10] sm:$0xff]
        %v645 = vld [vmem:[#allocation2 + $0x18] sm:$0xff]
        %v646 = vpack.c.bf16 %v643, %v642
        %v647 = vpack.c.bf16 %v645, %v644
        %v648 = vrot.slane %v642, 7
        %v649 = vrot.slane %v643, 7
        %v650 = vrot.slane %v644, 7
        %v651 = vrot.slane %v645, 7
        %v652 = vlaneseq
        %v653 = vshrl.u32 %v652, 7
        %vm654 = vcmp.lt.s32.totalorder %v653, 1
        %v655 = vsel %vm654, %v650, %v651
        %v656 = vsel %vm654, %v649, %v650
        %v657 = vsel %vm654, %v648, %v649
        %v658 = vsel %vm654, %v651, %v648
        %v659 = vld [vmem:[%s2] sm:$0xff]
        %v660 = vld [vmem:[%s2 + $0x8] sm:$0xff]
        %v661 = vld [vmem:[%s2 + $0x10] sm:$0xff]
        %v662 = vld [vmem:[%s2 + $0x18] sm:$0xff]
        %664 = vset.pattern.permute.xlu0 0
        %665 = vperm.xlu0 %664, %v659
        %v666 = vpop.permute.xlu0 %665
        %669 = vset.pattern.permute.xlu0 0
        %670 = vperm.xlu0 %669, %v660
        %v671 = vpop.permute.xlu0 %670
        %674 = vset.pattern.permute.xlu0 0
        %675 = vperm.xlu0 %674, %v661
        %v676 = vpop.permute.xlu0 %675
        %679 = vset.pattern.permute.xlu0 0
        %680 = vperm.xlu0 %679, %v662
        %v681 = vpop.permute.xlu0 %680
        %v683 = vmul.f32 %v658, %v666
        %v684 = vmul.f32 %v657, %v671
        %v685 = vmul.f32 %v656, %v676
        %v686 = vmul.f32 %v655, %v681
        %v687 = vpack.c.bf16 %v684, %v683
        %v688 = vpack.c.bf16 %v686, %v685
        %v689 = vrot.slane %v642, 1
        %v690 = vrot.slane %v643, 1
        %v691 = vrot.slane %v644, 1
        %v692 = vrot.slane %v645, 1
        %vm693 = vcmp.lt.s32.totalorder %v653, 7
        %v694 = vsel %vm693, %v691, %v692
        %v695 = vsel %vm693, %v690, %v691
        %v696 = vsel %vm693, %v689, %v690
        %v697 = vsel %vm693, %v692, %v689
        %v698 = vld [vmem:[%s3] sm:$0xff]
        %v699 = vld [vmem:[%s3 + $0x8] sm:$0xff]
        %v700 = vld [vmem:[%s3 + $0x10] sm:$0xff]
        %v701 = vld [vmem:[%s3 + $0x18] sm:$0xff]
        %703 = vset.pattern.permute.xlu0 0
        %704 = vperm.xlu0 %703, %v698
        %v705 = vpop.permute.xlu0 %704
        %708 = vset.pattern.permute.xlu0 0
        %709 = vperm.xlu0 %708, %v699
        %v710 = vpop.permute.xlu0 %709
        %713 = vset.pattern.permute.xlu0 0
        %714 = vperm.xlu0 %713, %v700
        %v715 = vpop.permute.xlu0 %714
        %718 = vset.pattern.permute.xlu0 0
        %719 = vperm.xlu0 %718, %v701
        %v720 = vpop.permute.xlu0 %719
        %v722 = vmul.f32 %v696, %v705
        %v723 = vmul.f32 %v695, %v710
        %v724 = vmul.f32 %v694, %v715
        %v725 = vmul.f32 %v697, %v720
        %v726 = vpack.c.bf16 %v723, %v722
        %v727 = vpack.c.bf16 %v725, %v724
        %v728 = vld [vmem:[%s531] sm:$0xf]
        %v729 = vld [vmem:[%s531 + $0x4] sm:$0xf]
        %v730 = vld [vmem:[%s531 + $0x8] sm:$0xf]
        %v731 = vld [vmem:[%s531 + $0xc] sm:$0xf]
        %v732 = vld [vmem:[%s526] sm:$0xf]
        %v733 = vld [vmem:[%s526 + $0x4] sm:$0xf]
        %v734 = vld [vmem:[%s526 + $0x8] sm:$0xf]
        %v735 = vld [vmem:[%s526 + $0xc] sm:$0xf]
        %v740 = vunpack.c.l.b16 %v732
        %v741 = vunpack.c.l.b16 %v733
        %v742 = vunpack.c.l.b16 %v734
        %v743 = vunpack.c.l.b16 %v735
        %v744 = vpack.c.b16 %v741, %v740
        %v745 = vpack.c.b16 %v743, %v742
        %vm748 = vcmask 261120
        %v750 = vsel %vm748, %v687, 0
        %v753 = vsel %vm748, %v688, 0
        %755 = vmatprep.subr.bf16.mxu0 0
        %756 = vmatpush1.bf16.msra.mxu0 %v744
        %757 = vmatprep.subr.bf16.mxu0 0
        %758 = vmatpush1.bf16.msra.mxu0 %v745
        %759 = vmatprep.subr.bf16.mxu0 0
        %760 = vmatpush1.bf16.msra.mxu0 0
        %761 = vmatprep.subr.bf16.mxu0 0
        %762 = vmatpush1.bf16.msra.mxu0 0
        %763 = vmatprep.subr.bf16.mxu0 0
        %764 = vmatpush1.bf16.msra.mxu0 0
        %765 = vmatprep.subr.bf16.mxu0 0
        %766 = vmatpush1.bf16.msra.mxu0 0
        %767 = vmatprep.subr.bf16.mxu0 0
        %768 = vmatpush1.bf16.msra.mxu0 0
        %769 = vmatprep.subr.bf16.mxu0 0
        %770 = vmatpush1.bf16.msra.mxu0 0
        %771 = vmatprep.subr.bf16.mxu0 0
        %772 = vmatpush1.bf16.msra.mxu0 0
        %773 = vmatprep.subr.bf16.mxu0 0
        %774 = vmatpush1.bf16.msra.mxu0 0
        %775 = vmatprep.subr.bf16.mxu0 0
        %776 = vmatpush1.bf16.msra.mxu0 0
        %777 = vmatprep.subr.bf16.mxu0 0
        %778 = vmatpush1.bf16.msra.mxu0 0
        %779 = vmatprep.subr.bf16.mxu0 0
        %780 = vmatpush1.bf16.msra.mxu0 0
        %781 = vmatprep.subr.bf16.mxu0 0
        %782 = vmatpush1.bf16.msra.mxu0 0
        %783 = vmatprep.subr.bf16.mxu0 0
        %784 = vmatpush1.bf16.msra.mxu0 0
        %785 = vmatprep.subr.bf16.mxu0 0
        %786 = vmatpush1.bf16.msra.mxu0 0
        %787 = vmatprep.mubr.bf16.mxu0 0
        %788 = vmatmul.mubr.bf16.gmra.mrb[0].mxu0 %v750
        %v789 = vpop.f32.mrb[0].mxu0
        %v790 = vadd.f32 0.0, %v789
        %v791 = vpop.f32.mrb[0].mxu0
        %v792 = vpop.f32.mrb[0].mxu0
        %v793 = vadd.f32 0.0, %v792
        %v794 = vpop.f32.mrb[0].mxu0
        %795 = vmatprep.mubr.bf16.mxu0 0
        %796 = vmatmul.mubr.bf16.gmra.mrb[0].mxu0 %v753
        %v797 = vpop.f32.mrb[0].mxu0
        %v798 = vadd.f32 0.0, %v797
        %v799 = vpop.f32.mrb[0].mxu0
        %v800 = vpop.f32.mrb[0].mxu0
        %v801 = vadd.f32 0.0, %v800
        %v802 = vpop.f32.mrb[0].mxu0
        %803 = vdwg.mxu0
        %v808 = vunpack.c.l.b16 %v728
        %v809 = vunpack.c.l.b16 %v729
        %v810 = vunpack.c.l.b16 %v730
        %v811 = vunpack.c.l.b16 %v731
        %v812 = vpack.c.b16 %v809, %v808
        %v813 = vpack.c.b16 %v811, %v810
        %v817 = vsel %vm748, %v646, 0
        %v820 = vsel %vm748, %v647, 0
        %822 = vmatprep.subr.bf16.mxu0 0
        %823 = vmatpush1.bf16.msra.mxu0 %v812
        %824 = vmatprep.subr.bf16.mxu0 0
        %825 = vmatpush1.bf16.msra.mxu0 %v813
        %826 = vmatprep.subr.bf16.mxu0 0
        %827 = vmatpush1.bf16.msra.mxu0 0
        %828 = vmatprep.subr.bf16.mxu0 0
        %829 = vmatpush1.bf16.msra.mxu0 0
        %830 = vmatprep.subr.bf16.mxu0 0
        %831 = vmatpush1.bf16.msra.mxu0 0
        %832 = vmatprep.subr.bf16.mxu0 0
        %833 = vmatpush1.bf16.msra.mxu0 0
        %834 = vmatprep.subr.bf16.mxu0 0
        %835 = vmatpush1.bf16.msra.mxu0 0
        %836 = vmatprep.subr.bf16.mxu0 0
        %837 = vmatpush1.bf16.msra.mxu0 0
        %838 = vmatprep.subr.bf16.mxu0 0
        %839 = vmatpush1.bf16.msra.mxu0 0
        %840 = vmatprep.subr.bf16.mxu0 0
        %841 = vmatpush1.bf16.msra.mxu0 0
        %842 = vmatprep.subr.bf16.mxu0 0
        %843 = vmatpush1.bf16.msra.mxu0 0
        %844 = vmatprep.subr.bf16.mxu0 0
        %845 = vmatpush1.bf16.msra.mxu0 0
        %846 = vmatprep.subr.bf16.mxu0 0
        %847 = vmatpush1.bf16.msra.mxu0 0
        %848 = vmatprep.subr.bf16.mxu0 0
        %849 = vmatpush1.bf16.msra.mxu0 0
        %850 = vmatprep.subr.bf16.mxu0 0
        %851 = vmatpush1.bf16.msra.mxu0 0
        %852 = vmatprep.subr.bf16.mxu0 0
        %853 = vmatpush1.bf16.msra.mxu0 0
        %854 = vmatprep.mubr.bf16.mxu0 0
        %855 = vmatmul.mubr.bf16.gmra.mrb[0].mxu0 %v817
        %v856 = vpop.f32.mrb[0].mxu0
        %v857 = vadd.f32 %v790, %v856
        %v858 = vpop.f32.mrb[0].mxu0
        %v859 = vpop.f32.mrb[0].mxu0
        %v860 = vadd.f32 %v793, %v859
        %v861 = vpop.f32.mrb[0].mxu0
        %862 = vmatprep.mubr.bf16.mxu0 0
        %863 = vmatmul.mubr.bf16.gmra.mrb[0].mxu0 %v820
        %v864 = vpop.f32.mrb[0].mxu0
        %v865 = vadd.f32 %v798, %v864
        %v866 = vpop.f32.mrb[0].mxu0
        %v867 = vpop.f32.mrb[0].mxu0
        %v868 = vadd.f32 %v801, %v867
        %v869 = vpop.f32.mrb[0].mxu0
        %870 = vdwg.mxu0
        %v871 = vld [vmem:[%s536] sm:$0xf]
        %v872 = vld [vmem:[%s536 + $0x4] sm:$0xf]
        %v873 = vld [vmem:[%s536 + $0x8] sm:$0xf]
        %v874 = vld [vmem:[%s536 + $0xc] sm:$0xf]
        %v879 = vunpack.c.l.b16 %v871
        %v880 = vunpack.c.l.b16 %v872
        %v881 = vunpack.c.l.b16 %v873
        %v882 = vunpack.c.l.b16 %v874
        %v883 = vpack.c.b16 %v880, %v879
        %v884 = vpack.c.b16 %v882, %v881
        %v888 = vsel %vm748, %v726, 0
        %v891 = vsel %vm748, %v727, 0
        %893 = vmatprep.subr.bf16.mxu0 0
        %894 = vmatpush1.bf16.msra.mxu0 %v883
        %895 = vmatprep.subr.bf16.mxu0 0
        %896 = vmatpush1.bf16.msra.mxu0 %v884
        %897 = vmatprep.subr.bf16.mxu0 0
        %898 = vmatpush1.bf16.msra.mxu0 0
        %899 = vmatprep.subr.bf16.mxu0 0
        %900 = vmatpush1.bf16.msra.mxu0 0
        %901 = vmatprep.subr.bf16.mxu0 0
        %902 = vmatpush1.bf16.msra.mxu0 0
        %903 = vmatprep.subr.bf16.mxu0 0
        %904 = vmatpush1.bf16.msra.mxu0 0
        %905 = vmatprep.subr.bf16.mxu0 0
        %906 = vmatpush1.bf16.msra.mxu0 0
        %907 = vmatprep.subr.bf16.mxu0 0
        %908 = vmatpush1.bf16.msra.mxu0 0
        %909 = vmatprep.subr.bf16.mxu0 0
        %910 = vmatpush1.bf16.msra.mxu0 0
        %911 = vmatprep.subr.bf16.mxu0 0
        %912 = vmatpush1.bf16.msra.mxu0 0
        %913 = vmatprep.subr.bf16.mxu0 0
        %914 = vmatpush1.bf16.msra.mxu0 0
        %915 = vmatprep.subr.bf16.mxu0 0
        %916 = vmatpush1.bf16.msra.mxu0 0
        %917 = vmatprep.subr.bf16.mxu0 0
        %918 = vmatpush1.bf16.msra.mxu0 0
        %919 = vmatprep.subr.bf16.mxu0 0
        %920 = vmatpush1.bf16.msra.mxu0 0
        %921 = vmatprep.subr.bf16.mxu0 0
        %922 = vmatpush1.bf16.msra.mxu0 0
        %923 = vmatprep.subr.bf16.mxu0 0
        %924 = vmatpush1.bf16.msra.mxu0 0
        %925 = vmatprep.mubr.bf16.mxu0 0
        %926 = vmatmul.mubr.bf16.gmra.mrb[0].mxu0 %v888
        %v927 = vpop.f32.mrb[0].mxu0
        %v928 = vadd.f32 0.0, %v927
        %v929 = vpop.f32.mrb[0].mxu0
        %v930 = vpop.f32.mrb[0].mxu0
        %v931 = vadd.f32 0.0, %v930
        %v932 = vpop.f32.mrb[0].mxu0
        %933 = vmatprep.mubr.bf16.mxu0 0
        %934 = vmatmul.mubr.bf16.gmra.mrb[0].mxu0 %v891
        %v935 = vpop.f32.mrb[0].mxu0
        %v936 = vadd.f32 0.0, %v935
        %v937 = vpop.f32.mrb[0].mxu0
        %v938 = vpop.f32.mrb[0].mxu0
        %v939 = vadd.f32 0.0, %v938
        %v940 = vpop.f32.mrb[0].mxu0
        %941 = vdwg.mxu0
        %v942 = vadd.f32 %v857, %v928
        %v943 = vadd.f32 %v860, %v931
        %v944 = vadd.f32 %v865, %v936
        %v945 = vadd.f32 %v868, %v939
        %v946 = vld [vmem:[%s539] sm:$0x1]
        %v948 = vlaneseq
        %v949 = vshrl.u32 %v948, 7
        %v950 = vsub.s32 0, %v949
        %v951 = vrot.slane %v946, %v950
        %v953 = vadd.f32 %v942, %v951
        %v954 = vadd.f32 %v943, %v951
        %v955 = vadd.f32 %v944, %v951
        %v956 = vadd.f32 %v945, %v951
        %v957 = vmul.f32 %v953, 0.5
        %v958 = vmul.f32 %v954, 0.5
        %v959 = vmul.f32 %v955, 0.5
        %v960 = vmul.f32 %v956, 0.5
        %v961 = vtanh.pop %v957
        %v962 = vtanh.pop %v958
        %v963 = vtanh.pop %v959
        %v964 = vtanh.pop %v960
        %v965 = vmul.f32 %v961, 0.5
        %v966 = vmul.f32 %v962, 0.5
        %v967 = vmul.f32 %v963, 0.5
        %v968 = vmul.f32 %v964, 0.5
        %v969 = vadd.f32 %v965, 0.5
        %v970 = vadd.f32 %v966, 0.5
        %v971 = vadd.f32 %v967, 0.5
        %v972 = vadd.f32 %v968, 0.5
        %977 = vrot.lane.b32.xlu0 %v969, 96
        %v978 = vpop.permute.xlu0 %977
        %979 = vrot.lane.b32.xlu0 %v970, 96
        %v980 = vpop.permute.xlu0 %979
        %981 = vrot.lane.b32.xlu0 %v971, 96
        %v982 = vpop.permute.xlu0 %981
        %983 = vrot.lane.b32.xlu0 %v972, 96
        %v984 = vpop.permute.xlu0 %983
        %v989 = vmul.f32 %v953, %v978
        %v990 = vmul.f32 %v954, %v980
        %v991 = vmul.f32 %v955, %v982
        %v992 = vmul.f32 %v956, %v984
        %v993 = vadd.f32 %v989, %v642
        %v994 = vadd.f32 %v990, %v643
        %v995 = vadd.f32 %v991, %v644
        %v996 = vadd.f32 %v992, %v645
        %v997 = vmul.f32 %v993, 0.70710677
        %v998 = vmul.f32 %v994, 0.70710677
        %v999 = vmul.f32 %v995, 0.70710677
        %v1000 = vmul.f32 %v996, 0.70710677
        %1001 = vst.msk [vmem:[#allocation2] sm:$0xff] %vm748, %v997
        %1002 = vst.msk [vmem:[#allocation2 + $0x8] sm:$0xff] %vm748, %v998
        %1003 = vst.msk [vmem:[#allocation2 + $0x10] sm:$0xff] %vm748, %v999
        %1004 = vst.msk [vmem:[#allocation2 + $0x18] sm:$0xff] %vm748, %v1000
        %p1005 = scmp.eq.s32.totalorder %s31, 1
        // Predicated region
        $region81: #{tpu_custom_call.1} parent=71 // pred_check
          %p1006 = pneg %p1005
        $region82: #{tpu_custom_call.1} parent=71 // pred_check_branch
          %1008 = sbr.rel (%p1006) target = $region84
        $region83: #{tpu_custom_call.1} parent=71 // pred_region
          %v1009 = vsel %vm748, %v997, 0.0
          %v1010 = vsel %vm748, %v998, 0.0
          %v1011 = vadd.f32 %v1009, %v1010
          %v1012 = vrot.slane %v1011, 4
          %v1013 = vadd.f32 %v1011, %v1012
          %v1014 = vrot.slane %v1013, 2
          %v1015 = vadd.f32 %v1013, %v1014
          %v1016 = vrot.slane %v1015, 1
          %v1017 = vadd.f32 %v1015, %v1016
          %v1018 = vsel %vm748, %v999, 0.0
          %v1019 = vsel %vm748, %v1000, 0.0
          %v1020 = vadd.f32 %v1018, %v1019
          %v1021 = vrot.slane %v1020, 4
          %v1022 = vadd.f32 %v1020, %v1021
          %v1023 = vrot.slane %v1022, 2
          %v1024 = vadd.f32 %v1022, %v1023
          %v1025 = vrot.slane %v1024, 1
          %v1026 = vadd.f32 %v1024, %v1025
          %v1027 = vld [vmem:[%s521] sm:$0x3]
          %1029 = vset.pattern.permute.xlu0 0
          %1030 = vperm.xlu0 %1029, %v1027
          %v1031 = vpop.permute.xlu0 %1030
          %v1032 = vrot.slane %v1031, 1
          %v1035 = vmul.f32 %v1017, %v1031
          %v1036 = vmul.f32 %v1026, %v1032
          %v1037 = vpack.c.bf16 %v1035, %v1035
          %v1038 = vpack.c.bf16 %v1036, %v1036
          %v1039 = vld [vmem:[%s11] sm:$0xf]
          %v1040 = vld [vmem:[%s11 + $0x4] sm:$0xf]
          %v1041 = vld [vmem:[%s11 + $0x8] sm:$0xf]
          %v1042 = vld [vmem:[%s11 + $0xc] sm:$0xf]
          %v1043 = vld [vmem:[%s12] sm:$0x1]
          %v1045 = vlaneseq
          %v1046 = vshrl.u32 %v1045, 7
          %v1047 = vsub.s32 0, %v1046
          %v1048 = vrot.slane %v1043, %v1047
          %v1052 = vunpack.c.l.b16 %v1037
          %v1053 = vunpack.c.l.b16 %v1038
          %v1054 = vrot.slane %v1053, 7
          %vm1055 = vcmask 1041409
          %v1056 = vsel %vm1055, %v1054, %v1052
          %v1057 = vpack.c.b16 %v1056, %v1056
          %v1062 = vunpack.c.l.b16 %v1039
          %v1063 = vunpack.c.l.b16 %v1040
          %v1064 = vunpack.c.l.b16 %v1041
          %v1065 = vunpack.c.l.b16 %v1042
          %v1066 = vpack.c.b16 %v1063, %v1062
          %v1067 = vpack.c.b16 %v1065, %v1064
          %v1071 = vsel %vm748, %v1057, 0
          %1073 = vmatprep.subr.bf16.mxu0 0
          %1074 = vmatpush1.bf16.msra.mxu0 %v1066
          %1075 = vmatprep.subr.bf16.mxu0 0
          %1076 = vmatpush1.bf16.msra.mxu0 %v1067
          %1077 = vmatprep.subr.bf16.mxu0 0
          %1078 = vmatpush1.bf16.msra.mxu0 0
          %1079 = vmatprep.subr.bf16.mxu0 0
          %1080 = vmatpush1.bf16.msra.mxu0 0
          %1081 = vmatprep.subr.bf16.mxu0 0
          %1082 = vmatpush1.bf16.msra.mxu0 0
          %1083 = vmatprep.subr.bf16.mxu0 0
          %1084 = vmatpush1.bf16.msra.mxu0 0
          %1085 = vmatprep.subr.bf16.mxu0 0
          %1086 = vmatpush1.bf16.msra.mxu0 0
          %1087 = vmatprep.subr.bf16.mxu0 0
          %1088 = vmatpush1.bf16.msra.mxu0 0
          %1089 = vmatprep.subr.bf16.mxu0 0
          %1090 = vmatpush1.bf16.msra.mxu0 0
          %1091 = vmatprep.subr.bf16.mxu0 0
          %1092 = vmatpush1.bf16.msra.mxu0 0
          %1093 = vmatprep.subr.bf16.mxu0 0
          %1094 = vmatpush1.bf16.msra.mxu0 0
          %1095 = vmatprep.subr.bf16.mxu0 0
          %1096 = vmatpush1.bf16.msra.mxu0 0
          %1097 = vmatprep.subr.bf16.mxu0 0
          %1098 = vmatpush1.bf16.msra.mxu0 0
          %1099 = vmatprep.subr.bf16.mxu0 0
          %1100 = vmatpush1.bf16.msra.mxu0 0
          %1101 = vmatprep.subr.bf16.mxu0 0
          %1102 = vmatpush1.bf16.msra.mxu0 0
          %1103 = vmatprep.subr.bf16.mxu0 0
          %1104 = vmatpush1.bf16.msra.mxu0 0
          %1105 = vmatprep.mubr.bf16.mxu0 0
          %1106 = vmatmul.mubr.bf16.gmra.mrb[0].mxu0 %v1071
          %v1107 = vpop.f32.mrb[0].mxu0
          %v1108 = vadd.f32 %v1048, %v1107
          %v1109 = vpop.f32.mrb[0].mxu0
          %v1110 = vpop.f32.mrb[0].mxu0
          %v1111 = vpop.f32.mrb[0].mxu0
          %1112 = vdwg.mxu0
          %1113 = vst [vmem:[#allocation6] sm:$0x3] %v1108
        $region84: #{tpu_custom_call.1} parent=71 // pred_fallthru
          _
        // Predicated region
        $region85: #{tpu_custom_call.1} parent=71 // pred_check
          %p1114 = pneg %p359
        $region86: #{tpu_custom_call.1} parent=71 // pred_check_branch
          %1116 = sbr.rel (%p1114) target = $region88
        $region87: #{tpu_custom_call.1} parent=71 // pred_region
          %s1118 = ssub.s32 32, 32
          %1119 = vsyncadd [#allocation5], %s1118
          %s1120 = smul.addr %s30, 32
          %s1121 = scalar_lea.hbm %s13, %s1120
          %s1123 = sshll.u32 [#allocation6], 4
          %s1124 = int_to_ptr.vmem [resolvable:$true] %s1123
          %1126 = dma.vmem_to_hbm [thread:$0]  %s1124, 32, %s1121, [#allocation5]
        $region88: #{tpu_custom_call.1} parent=71 // pred_fallthru
          _
        // Predicated region
        $region89: #{tpu_custom_call.1} parent=71 // pred_check
          %p1127 = pneg %p359
        $region90: #{tpu_custom_call.1} parent=71 // pred_check_branch
          %1129 = sbr.rel (%p1127) target = $region92
        $region91: #{tpu_custom_call.1} parent=71 // pred_region
          %1130 = dma.done [#allocation5], 32
        $region92: #{tpu_custom_call.1} parent=71 // pred_fallthru
          _
      $region72: #{tpu_custom_call.1} parent=5 // pred_fallthru
        _
      %p1131 = scmp.le.s32.totalorder 2, %s21
      // Predicated region
      $region93: #{tpu_custom_call.1} parent=5 // pred_check
        %p1132 = pneg %p1131
      $region94: #{tpu_custom_call.1} parent=5 // pred_check_branch
        %1134 = sbr.rel (%p1132) target = $region96
      $region95: #{tpu_custom_call.1} parent=5 // pred_region
        %s1135 = ssub.s32 %s21, 2
      $region96: #{tpu_custom_call.1} parent=5 // pred_fallthru
        _
    $region6: #{tpu_custom_call.1} parent=1 // loop_footer
      %s25 = sadd.s32 1, %s21
    $region7: #{tpu_custom_call.1} parent=1 // loop_footer_branch
      %20 = sbr.rel target = $region3
    $region8: #{tpu_custom_call.1} parent=1 // loop_exit
      _
    %1136 = vsyncpa [#allocation4], 1
    %s1137 = scalar_lea.sflag [#allocation4], 1
    %1138 = vsyncpa %s1137, 1
    %1139 = vsyncpa [#allocation5], 1
    %s1140 = scalar_lea.sflag [#allocation5], 1
    %1141 = vsyncpa %s1140, 1

</llo_original>
